<compile_context>
chip_gen: v7x
topology: tpu7x:2x2x1
jax: 0.10.0
libtpu: 0.0.40
codegen_flags: <defaults>
</compile_context>

<pallas_src>
import functools

import jax
import jax.numpy as jnp
from jax.experimental import pallas as pl
from jax.experimental.pallas import tpu as pltpu

IN_FEATURES = 256
OUT_FEATURES = 10
OUT_PADDED = 128      # lane-dense output width (zero-padded columns 10..127)
TM_MAX = 1024         # batch tile rows; 2x-buffered x tile = 2 MiB, fits all gens


def linear_kernel(x_ref, w_ref, b_ref, o_ref):
    # Fused matmul + bias add for one (TM, 256) batch tile.
    acc = jnp.dot(x_ref[...], w_ref[...], preferred_element_type=jnp.float32)
    o_ref[...] = (acc + b_ref[...]).astype(o_ref.dtype)


def _round_up(n, m):
    return ((n + m - 1) // m) * m


@functools.partial(jax.jit, static_argnames=())
def head_cnn_forward(x, w_t, b):
    """x: (B, 256), w_t: (256, 10), b: (1, 10) -> (B, 10) == nn.Linear(256, 10)."""
    B = x.shape[0]

    # Pick a batch tile and pad B so the tile divides it exactly
    # (keeps block shapes (8,128)-aligned; padded rows are sliced off below).
    if B <= TM_MAX:
        tm = max(8, _round_up(B, 8))
        b_pad = tm
    else:
        tm = TM_MAX
        b_pad = _round_up(B, tm)
    if b_pad != B:
        x = jnp.pad(x, ((0, b_pad - B), (0, 0)))

    # Zero-pad weight/bias to a 128-wide output so stores are lane-dense.
    w_p = jnp.pad(w_t, ((0, 0), (0, OUT_PADDED - OUT_FEATURES)))
    b_p = jnp.pad(b, ((0, 0), (0, OUT_PADDED - OUT_FEATURES)))

    # TODO(synk): for HBM-bound large-batch inference, casting x/w to bfloat16
    # (keeping f32 accumulation) halves input traffic; kept f32 here to match
    # nn.Linear numerics exactly.
    out = pl.pallas_call(
        linear_kernel,
        out_shape=jax.ShapeDtypeStruct((b_pad, OUT_PADDED), x.dtype),
        grid=(b_pad // tm,),
        in_specs=[
            pl.BlockSpec((tm, IN_FEATURES), lambda i: (i, 0)),
            pl.BlockSpec((IN_FEATURES, OUT_PADDED), lambda i: (0, 0)),
            pl.BlockSpec((1, OUT_PADDED), lambda i: (0, 0)),
        ],
        out_specs=pl.BlockSpec((tm, OUT_PADDED), lambda i: (i, 0)),
        compiler_params=pltpu.CompilerParams(
            dimension_semantics=("parallel",),
        ),
    )(x, w_p, b_p)

    return out[:B, :OUT_FEATURES]


def init_params(key):
    # Deterministic init mimicking nn.Linear's uniform(-1/sqrt(fan_in), ...).
    kw, kb = jax.random.split(key)
    bound = 1.0 / jnp.sqrt(jnp.float32(IN_FEATURES))
    # PyTorch stores weight as (out, in); we keep the transposed (in, out) layout.
    w_t = jax.random.uniform(
        kw, (IN_FEATURES, OUT_FEATURES), jnp.float32, -bound, bound
    )
    b = jax.random.uniform(kb, (1, OUT_FEATURES), jnp.float32, -bound, bound)
    return w_t, b


if __name__ == "__main__":
    key = jax.random.PRNGKey(0)
    k_in, k_param = jax.random.split(key)

    B = 8
    x = jax.random.normal(k_in, (B, IN_FEATURES), jnp.float32)
    w_t, b = init_params(k_param)

    out = head_cnn_forward(x, w_t, b)
    out = jax.block_until_ready(out)

    # Reference check against plain JAX linear (== nn.Linear semantics).
    ref = x @ w_t + b
    assert out.shape == (B, OUT_FEATURES)
    assert jnp.allclose(out, ref, atol=1e-5, rtol=1e-5)

    print("KERNEL_OK")
</pallas_src>

<mosaic_0001>
module attributes {stable_mosaic.version = 11 : i64} {
  func.func @linear_kernel(%arg0: i32, %arg1: memref<8x256xf32, #tpu.memory_space<vmem>>, %arg2: memref<256x128xf32, #tpu.memory_space<vmem>>, %arg3: memref<1x128xf32, #tpu.memory_space<vmem>>, %arg4: memref<8x128xf32, #tpu.memory_space<vmem>>) attributes {dimension_semantics = [#tpu.dimension_semantics<parallel>], iteration_bounds = array<i64: 1>, scalar_prefetch = 0 : i64, scratch_operands = 0 : i64, tpu.core_type = #tpu.core_type<tc>, window_params = [{transform_indices = @transform_0, window_bounds = array<i64: 8, 256>}, {pipeline_mode = #tpu.pipeline_mode<synchronous>, transform_indices = @transform_1, window_bounds = array<i64: 256, 128>}, {pipeline_mode = #tpu.pipeline_mode<synchronous>, transform_indices = @transform_2, window_bounds = array<i64: 1, 128>}, {transform_indices = @transform_3, window_bounds = array<i64: 8, 128>}]} {
    %c0 = arith.constant 0 : index
    %c0_0 = arith.constant 0 : index
    %0 = vector.load %arg1[%c0, %c0_0] : memref<8x256xf32, #tpu.memory_space<vmem>>, vector<8x256xf32>
    %c0_1 = arith.constant 0 : index
    %c0_2 = arith.constant 0 : index
    %1 = vector.load %arg2[%c0_1, %c0_2] : memref<256x128xf32, #tpu.memory_space<vmem>>, vector<256x128xf32>
    %cst = arith.constant dense<0.000000e+00> : vector<8x128xf32>
    %2 = tpu.matmul %0, %1, %cst {dimension_numbers = #tpu.dot_dimension_numbers<[1], [0], [0], [1], [0, 0, 1, 1], [], []>} : vector<8x256xf32>, vector<256x128xf32>, vector<8x128xf32> -> vector<8x128xf32>
    %c0_3 = arith.constant 0 : index
    %c0_4 = arith.constant 0 : index
    %3 = vector.load %arg3[%c0_3, %c0_4] : memref<1x128xf32, #tpu.memory_space<vmem>>, vector<1x128xf32>
    %4 = vector.broadcast %3 : vector<1x128xf32> to vector<8x128xf32>
    %5 = arith.addf %2, %4 : vector<8x128xf32>
    %c0_5 = arith.constant 0 : index
    %c0_6 = arith.constant 0 : index
    %6 = vector.load %arg4[%c0_5, %c0_6] : memref<8x128xf32, #tpu.memory_space<vmem>>, vector<8x128xf32>
    tpu.vector_store %arg4[%c0_5, %c0_6], %5 {strides = array<i32>} : memref<8x128xf32, #tpu.memory_space<vmem>>, vector<8x128xf32>,
    return
  }
  func.func @transform_0(%arg0: i32) -> (i32, i32) {
    %c0_i32 = arith.constant 0 : i32
    %c0_i32_0 = arith.constant 0 : i32
    return %arg0, %c0_i32 : i32, i32
  }
  func.func @transform_1(%arg0: i32) -> (i32, i32) {
    %c0_i32 = arith.constant 0 : i32
    %c0_i32_0 = arith.constant 0 : i32
    %c0_i32_1 = arith.constant 0 : i32
    return %c0_i32, %c0_i32_0 : i32, i32
  }
  func.func @transform_2(%arg0: i32) -> (i32, i32) {
    %c0_i32 = arith.constant 0 : i32
    %c0_i32_0 = arith.constant 0 : i32
    %c0_i32_1 = arith.constant 0 : i32
    return %c0_i32, %c0_i32_0 : i32, i32
  }
  func.func @transform_3(%arg0: i32) -> (i32, i32) {
    %c0_i32 = arith.constant 0 : i32
    %c0_i32_0 = arith.constant 0 : i32
    return %arg0, %c0_i32 : i32, i32
  }
}

</mosaic_0001>

<llo_original>
// kernel: head_cnn_forward.1
$region0: #{head_cnn_forward.1}
  #allocation0 [shape = 'u32[]', space=smem, size = 0x4, offset = 0x4, fixed_abs, tag = 'smem constant byte address 0x4 - core index']
  #allocation1 [shape = 'u32[144,128]{1,0:T(1,128)}', space=vmem, size = 0x12000, scoped, tag = 'internal scratch']
  %s0 = inlined_call_operand.vmem [shape: f32[8,256], index: 0, kind: input, shape index: {}]
  %s1 = inlined_call_operand.vmem [shape: f32[256,128], index: 1, kind: input, shape index: {}]
  %s2 = inlined_call_operand.vmem [shape: f32[1,128], index: 2, kind: input, shape index: {}]
  %s3 = inlined_call_operand.hbm [shape: f32[8,128], index: 3, kind: output, shape index: {}]
  %s4 = sld [smem:[#allocation0]]
  $region22: #{head_cnn_forward.1} parent=0
    _
  %s6 = ssub.s32 1, %s4
  %s7 = scalar_select 0, %s6, %s4
  $region1: #{head_cnn_forward.1} parent=0
    #allocation2 [shape = 'u8[4096]{0}', space=vmem, size = 0x1000, scoped, tag = 'output window, operand 0, single buffered']
    #allocation3 [shape = 's32[1]{0}', space=sflag, size = 0x4, scoped, tag = 'scoped memory for head_cnn_forward.1']
    %8 = vsyncpa [#allocation3], 0
    // Predicated region
    $region2: #{head_cnn_forward.1} parent=1 // pred_check
      _
    $region3: #{head_cnn_forward.1} parent=1 // pred_check_branch
      %10 = sbr.rel (0) target = $region5
    $region4: #{head_cnn_forward.1} parent=1 // pred_region
      _
    $region5: #{head_cnn_forward.1} parent=1 // pred_fallthru
      _
    // Predicated region
    $region6: #{head_cnn_forward.1} parent=1 // pred_check
      _
    $region7: #{head_cnn_forward.1} parent=1 // pred_check_branch
      %12 = sbr.rel (0) target = $region9
    $region8: #{head_cnn_forward.1} parent=1 // pred_region
      _
    $region9: #{head_cnn_forward.1} parent=1 // pred_fallthru
      _
    // Predicated region
    $region10: #{head_cnn_forward.1} parent=1 // pred_check
      _
    $region11: #{head_cnn_forward.1} parent=1 // pred_check_branch
      %14 = sbr.rel (0) target = $region13
    $region12: #{head_cnn_forward.1} parent=1 // pred_region
      _
    $region13: #{head_cnn_forward.1} parent=1 // pred_fallthru
      _
    %v15 = vld [vmem:[%s0] sm:$0xff]
    %v16 = vld [vmem:[%s0 + $0x8] sm:$0xff]
    %v17 = vld [vmem:[%s1] sm:$0xff]
    %v18 = vld [vmem:[%s1 + $0x8] sm:$0xff]
    %v19 = vld [vmem:[%s1 + $0x10] sm:$0xff]
    %v20 = vld [vmem:[%s1 + $0x18] sm:$0xff]
    %v21 = vld [vmem:[%s1 + $0x20] sm:$0xff]
    %v22 = vld [vmem:[%s1 + $0x28] sm:$0xff]
    %v23 = vld [vmem:[%s1 + $0x30] sm:$0xff]
    %v24 = vld [vmem:[%s1 + $0x38] sm:$0xff]
    %v25 = vld [vmem:[%s1 + $0x40] sm:$0xff]
    %v26 = vld [vmem:[%s1 + $0x48] sm:$0xff]
    %v27 = vld [vmem:[%s1 + $0x50] sm:$0xff]
    %v28 = vld [vmem:[%s1 + $0x58] sm:$0xff]
    %v29 = vld [vmem:[%s1 + $0x60] sm:$0xff]
    %v30 = vld [vmem:[%s1 + $0x68] sm:$0xff]
    %v31 = vld [vmem:[%s1 + $0x70] sm:$0xff]
    %v32 = vld [vmem:[%s1 + $0x78] sm:$0xff]
    %v33 = vld [vmem:[%s1 + $0x80] sm:$0xff]
    %v34 = vld [vmem:[%s1 + $0x88] sm:$0xff]
    %v35 = vld [vmem:[%s1 + $0x90] sm:$0xff]
    %v36 = vld [vmem:[%s1 + $0x98] sm:$0xff]
    %v37 = vld [vmem:[%s1 + $0xa0] sm:$0xff]
    %v38 = vld [vmem:[%s1 + $0xa8] sm:$0xff]
    %v39 = vld [vmem:[%s1 + $0xb0] sm:$0xff]
    %v40 = vld [vmem:[%s1 + $0xb8] sm:$0xff]
    %v41 = vld [vmem:[%s1 + $0xc0] sm:$0xff]
    %v42 = vld [vmem:[%s1 + $0xc8] sm:$0xff]
    %v43 = vld [vmem:[%s1 + $0xd0] sm:$0xff]
    %v44 = vld [vmem:[%s1 + $0xd8] sm:$0xff]
    %v45 = vld [vmem:[%s1 + $0xe0] sm:$0xff]
    %v46 = vld [vmem:[%s1 + $0xe8] sm:$0xff]
    %v47 = vld [vmem:[%s1 + $0xf0] sm:$0xff]
    %v48 = vld [vmem:[%s1 + $0xf8] sm:$0xff]
    %v49 = vld [vmem:[%s2] sm:$0x1]
    %v51 = vlaneseq
    %v52 = vshrl.u32 %v51, 7
    %v53 = vsub.s32 0, %v52
    %v54 = vrot.slane %v49, %v53
    %56 = vmatprep.subr.mxu0 0.0
    %57 = vmatpush1.msra.mxu0 %v17
    %58 = vmatprep.subr.mxu0 0.0
    %59 = vmatpush1.msra.mxu0 %v18
    %60 = vmatprep.subr.mxu0 0.0
    %61 = vmatpush1.msra.mxu0 %v19
    %62 = vmatprep.subr.mxu0 0.0
    %63 = vmatpush1.msra.mxu0 %v20
    %64 = vmatprep.subr.mxu0 0.0
    %65 = vmatpush1.msra.mxu0 %v21
    %66 = vmatprep.subr.mxu0 0.0
    %67 = vmatpush1.msra.mxu0 %v22
    %68 = vmatprep.subr.mxu0 0.0
    %69 = vmatpush1.msra.mxu0 %v23
    %70 = vmatprep.subr.mxu0 0.0
    %71 = vmatpush1.msra.mxu0 %v24
    %72 = vmatprep.subr.mxu0 0.0
    %73 = vmatpush1.msra.mxu0 %v25
    %74 = vmatprep.subr.mxu0 0.0
    %75 = vmatpush1.msra.mxu0 %v26
    %76 = vmatprep.subr.mxu0 0.0
    %77 = vmatpush1.msra.mxu0 %v27
    %78 = vmatprep.subr.mxu0 0.0
    %79 = vmatpush1.msra.mxu0 %v28
    %80 = vmatprep.subr.mxu0 0.0
    %81 = vmatpush1.msra.mxu0 %v29
    %82 = vmatprep.subr.mxu0 0.0
    %83 = vmatpush1.msra.mxu0 %v30
    %84 = vmatprep.subr.mxu0 0.0
    %85 = vmatpush1.msra.mxu0 %v31
    %86 = vmatprep.subr.mxu0 0.0
    %87 = vmatpush1.msra.mxu0 %v32
    %88 = vmatprep.subr.mxu0 0.0
    %89 = vmatpush1.msra.mxu0 %v33
    %90 = vmatprep.subr.mxu0 0.0
    %91 = vmatpush1.msra.mxu0 %v34
    %92 = vmatprep.subr.mxu0 0.0
    %93 = vmatpush1.msra.mxu0 %v35
    %94 = vmatprep.subr.mxu0 0.0
    %95 = vmatpush1.msra.mxu0 %v36
    %96 = vmatprep.subr.mxu0 0.0
    %97 = vmatpush1.msra.mxu0 %v37
    %98 = vmatprep.subr.mxu0 0.0
    %99 = vmatpush1.msra.mxu0 %v38
    %100 = vmatprep.subr.mxu0 0.0
    %101 = vmatpush1.msra.mxu0 %v39
    %102 = vmatprep.subr.mxu0 0.0
    %103 = vmatpush1.msra.mxu0 %v40
    %104 = vmatprep.subr.mxu0 0.0
    %105 = vmatpush1.msra.mxu0 %v41
    %106 = vmatprep.subr.mxu0 0.0
    %107 = vmatpush1.msra.mxu0 %v42
    %108 = vmatprep.subr.mxu0 0.0
    %109 = vmatpush1.msra.mxu0 %v43
    %110 = vmatprep.subr.mxu0 0.0
    %111 = vmatpush1.msra.mxu0 %v44
    %112 = vmatprep.subr.mxu0 0.0
    %113 = vmatpush1.msra.mxu0 %v45
    %114 = vmatprep.subr.mxu0 0.0
    %115 = vmatpush1.msra.mxu0 %v46
    %116 = vmatprep.subr.mxu0 0.0
    %117 = vmatpush1.msra.mxu0 %v47
    %118 = vmatprep.subr.mxu0 0.0
    %119 = vmatpush1.msra.mxu0 %v48
    %120 = vmatprep.mubr.f32.mxu0 %v16
    %121 = vmatmul.mubr.f32.gmra.mrb[0].mxu0 %v15
    %v122 = vpop.f32.mrb[0].mxu0
    %v123 = vadd.f32 %v54, %v122
    %v124 = vpop.f32.mrb[0].mxu0
    %125 = vdwg.mxu0
    %126 = vst [vmem:[#allocation2] sm:$0xff] %v123
    // Predicated region
    $region14: #{head_cnn_forward.1} parent=1 // pred_check
      _
    $region15: #{head_cnn_forward.1} parent=1 // pred_check_branch
      %128 = sbr.rel (0) target = $region17
    $region16: #{head_cnn_forward.1} parent=1 // pred_region
      %s130 = ssub.s32 128, 128
      %131 = vsyncadd [#allocation3], %s130
      %s133 = sshll.u32 [#allocation2], 4
      %s134 = int_to_ptr.vmem [resolvable:$true] %s133
      %136 = dma.vmem_to_hbm [thread:$0]  %s134, 128, %s3, [#allocation3]
    $region17: #{head_cnn_forward.1} parent=1 // pred_fallthru
      _
    // Predicated region
    $region18: #{head_cnn_forward.1} parent=1 // pred_check
      _
    $region19: #{head_cnn_forward.1} parent=1 // pred_check_branch
      %138 = sbr.rel (0) target = $region21
    $region20: #{head_cnn_forward.1} parent=1 // pred_region
      %139 = dma.done [#allocation3], 128
    $region21: #{head_cnn_forward.1} parent=1 // pred_fallthru
      _
    %140 = vsyncpa [#allocation3], 1

</llo_original>
